<compile_context>
chip_gen: v7x
topology: tpu7x:2x2x1
jax: 0.10.0
libtpu: 0.0.40
codegen_flags: <defaults>
</compile_context>

<pallas_src>
import functools
import math

import jax
import jax.numpy as jnp
from jax.experimental import pallas as pl
from jax.experimental.pallas import tpu as pltpu


# --------------------------------------------------------------------------
# Kernel
# --------------------------------------------------------------------------
def token_embedding_kernel(tok_ref, p_ref, b_ref, o_ref, *, groups):
    # tok_ref: (rt, g) packed tokens          p_ref: (g, L) scaled packed weight
    # b_ref:   (1, L)  scaled packed bias     o_ref: (rt, L), L = g*E lane-dense
    tok = tok_ref[...].astype(jnp.float32)
    if groups == 1:
        # K == 1 "matmul": plain broadcasted multiply on the VPU.
        acc = tok * p_ref[...]
    else:
        # Scatter each token across its E-lane group via a tiny block-diagonal
        # matmul; the kernel is writeback-bound so the MXU time is hidden.
        acc = jnp.dot(tok, p_ref[...], preferred_element_type=jnp.float32)
    # scale and bias are pre-folded into p_ref / b_ref (perf review item).
    o_ref[...] = (acc + b_ref[...]).astype(o_ref.dtype)


# --------------------------------------------------------------------------
# Host-side helpers
# --------------------------------------------------------------------------
def _min_sublanes(itemsize):
    return 8 if itemsize >= 4 else (16 if itemsize == 2 else 32)


def _tpu_defaults():
    """Best-effort, trace-time hardware hints (perf-only; safe fallbacks)."""
    kind = ""
    try:
        kind = jax.devices()[0].device_kind.lower()
    except Exception:
        pass
    megacore = any(t in kind for t in ("v7", "v4", "v5p"))
    # v7x: 3.2 TB/s per TC -> bigger blocks to amortize the ~0.35us step cost.
    target = (8 << 20) if "v7" in kind else (4 << 20)
    return {"num_tensorcores": 2 if megacore else 1,
            "target_block_bytes": target}


def _choose_row_tile(n_rows, min_sub, row_bytes_out, row_bytes_tok,
                     target_block_bytes, ncores, working_set_budget=36 << 20):
    """Rows per block of the packed (n_rows, L) output."""
    if n_rows <= min_sub:
        return n_rows                                  # single full-array block

    def rup(x):
        return -(-x // min_sub) * min_sub

    def rdown(x):
        return max(min_sub, (x // min_sub) * min_sub)

    # Double-buffered working set: 2 * (output block + lane-PADDED token block).
    cap_budget = rdown(working_set_budget // (2 * (row_bytes_out + row_bytes_tok)))
    cap_array = rup(n_rows)

    rt = rdown(target_block_bytes // row_bytes_out)    # bandwidth sweet spot
    rt = min(rt, cap_budget, cap_array)

    # Megacore only: keep the step count a multiple of ncores with >= 2 steps
    # per TensorCore.  Single-TC chips (v5e/v6e) keep the full-size block.
    if ncores > 1 and n_rows >= 2 * ncores * min_sub:
        steps = -(-n_rows // rt)
        want = -(-max(steps, 2 * ncores) // ncores) * ncores
        rt = min(rup(-(-n_rows // want)), cap_budget, cap_array)

    return max(rt, min_sub)


# --------------------------------------------------------------------------
# Wrapper
# --------------------------------------------------------------------------
def token_embedding(tokens, weight, bias, emb_size, *, out_dtype=None,
                    tok_dtype=None, target_block_bytes=None):
    """tokens: (B, S, 1).  weight: (emb_size, 1).  bias: (emb_size,).

    out_dtype defaults to weight.dtype; pass jnp.bfloat16 downstream-permitting
    to halve HBM write traffic (compute stays f32, cast at the store).
    """
    B, S, one = tokens.shape
    assert one == 1
    E = int(emb_size)
    N = B * S
    scale = math.sqrt(E)

    # ---- dtype policy ----------------------------------------------------
    out_dtype = jnp.dtype(weight.dtype if out_dtype is None else out_dtype)
    out_bytes = out_dtype.itemsize
    if tok_dtype is None:
        if out_bytes <= 2:
            tok_dtype = jnp.bfloat16              # halve padded token footprint
        elif jnp.issubdtype(jnp.dtype(tokens.dtype), jnp.floating):
            tok_dtype = tokens.dtype
        else:
            tok_dtype = jnp.float32               # integer tokens -> f32 compute
    tok_dtype = jnp.dtype(tok_dtype)
    tok_bytes = tok_dtype.itemsize

    # ---- lane-dense packing factor (generalized to any E) ----------------
    if E % 128 == 0:
        g = 1                                      # already lane-dense
    else:
        lc = math.lcm(E, 128)
        g = lc // E
        if lc > 1536 or g > 32:                    # cap the scatter matmul size
            g = 1                                  # fallback: masked stores
    L = g * E

    # ---- tiling ------------------------------------------------------------
    hw = _tpu_defaults()
    ncores = hw["num_tensorcores"]
    if target_block_bytes is None:
        target_block_bytes = hw["target_block_bytes"]

    min_sub = max(_min_sublanes(out_bytes), _min_sublanes(tok_bytes))
    n_rows = -(-N // g)                            # packed rows (pad only to g)
    tok_lanes = -(-g // 128) * 128                 # VMEM lane padding of tokens
    row_bytes_out = L * out_bytes
    row_bytes_tok = tok_lanes * tok_bytes

    row_tile = _choose_row_tile(n_rows, min_sub, row_bytes_out, row_bytes_tok,
                                target_block_bytes, ncores)
    n_steps = pl.cdiv(n_rows, row_tile)            # ragged last block is fine

    # ---- pack inputs (tokens are tiny relative to the output) ------------
    n_pad = n_rows * g
    tok_flat = tokens.reshape(N).astype(tok_dtype)
    if n_pad != N:
        tok_flat = jnp.pad(tok_flat, (0, n_pad - N))
    tok_packed = tok_flat.reshape(n_rows, g)

    # Fold sqrt(E) (and bias) into the packed parameters.
    w_row = weight.reshape(1, E).astype(jnp.float32) * scale
    b_row = bias.reshape(1, E).astype(jnp.float32) * scale
    if g == 1:
        p_mat = w_row                                             # (1, E)
        b_packed = b_row                                          # (1, E)
    else:
        # Block-diagonal scatter matrix: P[j, j*E + e] = sqrt(E) * W[e].
        p_mat = jnp.kron(jnp.eye(g, dtype=jnp.float32), w_row)    # (g, g*E)
        b_packed = jnp.tile(b_row, (1, g))                        # (1, g*E)

    # ---- VMEM budget sized from the actual tiles --------------------------
    out_blk = row_tile * L * out_bytes
    tok_blk = row_tile * tok_lanes * tok_bytes                    # lane-padded
    par_blk = (g + 1) * L * 4
    vmem_limit = int(min(max(2 * (out_blk + tok_blk + par_blk) + (4 << 20),
                             8 << 20), 100 << 20))

    cost = pl.CostEstimate(
        flops=2 * n_rows * g * L,
        transcendentals=0,
        bytes_accessed=(n_rows * g * tok_bytes
                        + n_rows * L * out_bytes
                        + (g + 1) * L * 4),
    )

    out = pl.pallas_call(
        functools.partial(token_embedding_kernel, groups=g),
        out_shape=jax.ShapeDtypeStruct((n_rows, L), out_dtype),
        grid_spec=pltpu.PrefetchScalarGridSpec(
            num_scalar_prefetch=0,
            grid=(n_steps,),
            in_specs=[
                pl.BlockSpec((row_tile, g), lambda i: (i, 0)),
                pl.BlockSpec((g, L), lambda i: (0, 0)),
                pl.BlockSpec((1, L), lambda i: (0, 0)),
            ],
            out_specs=pl.BlockSpec((row_tile, L), lambda i: (i, 0)),
        ),
        compiler_params=pltpu.CompilerParams(
            dimension_semantics=("parallel",),
            vmem_limit_bytes=vmem_limit,
        ),
        cost_estimate=cost,
    )(tok_packed, p_mat, b_packed)

    out = out.reshape(n_pad, E)          # free row-major unpack of the groups
    if n_pad != N:                       # only the <= (g-1)-token pad remains
        out = out[:N]
    return out.reshape(B, S, E)


# --------------------------------------------------------------------------
# Demo / self-check
# --------------------------------------------------------------------------
if __name__ == "__main__":
    # Small shapes consistent with the module: batch=2, seq=8, emb_size=32.
    batch, seq, emb_size = 2, 8, 32

    key = jax.random.PRNGKey(0)
    k_tok, k_w, k_b = jax.random.split(key, 3)

    tokens = jax.random.normal(k_tok, (batch, seq, 1), dtype=jnp.float32)
    # nn.Linear(1, emb_size): weight (emb_size, 1), bias (emb_size,)
    weight = jax.random.normal(k_w, (emb_size, 1), dtype=jnp.float32) * 0.1
    bias = jax.random.normal(k_b, (emb_size,), dtype=jnp.float32) * 0.1

    # Reference in plain JAX (same math as the PyTorch forward).
    ref = (tokens @ weight.T + bias) * math.sqrt(emb_size)

    # 1) Exact-semantics path (f32 output, matches the PyTorch module).
    out = jax.block_until_ready(token_embedding(tokens, weight, bias, emb_size))
    assert out.shape == (batch, seq, emb_size)
    assert out.dtype == jnp.float32
    assert jnp.allclose(out, ref, atol=1e-5, rtol=1e-5)

    # 2) Production default per perf review: bf16 output (and bf16-carried
    #    tokens), f32 compute, cast at the store -> ~2x less write traffic.
    out_bf16 = jax.block_until_ready(
        token_embedding(tokens, weight, bias, emb_size, out_dtype=jnp.bfloat16))
    assert out_bf16.dtype == jnp.bfloat16
    assert jnp.allclose(out_bf16.astype(jnp.float32), ref, atol=5e-2, rtol=5e-2)

    print("KERNEL_OK")
</pallas_src>

<mosaic_0001>
module attributes {stable_mosaic.version = 11 : i64} {
  func.func @token_embedding_kernel(%arg0: i32, %arg1: memref<4x4xf32, #tpu.memory_space<vmem>>, %arg2: memref<4x128xf32, #tpu.memory_space<vmem>>, %arg3: memref<1x128xf32, #tpu.memory_space<vmem>>, %arg4: memref<4x128xf32, #tpu.memory_space<vmem>>) attributes {dimension_semantics = [#tpu.dimension_semantics<parallel>], iteration_bounds = array<i64: 1>, scalar_prefetch = 0 : i64, scratch_operands = 0 : i64, tpu.core_type = #tpu.core_type<tc>, window_params = [{transform_indices = @transform_0, window_bounds = array<i64: 4, 4>}, {pipeline_mode = #tpu.pipeline_mode<synchronous>, transform_indices = @transform_1, window_bounds = array<i64: 4, 128>}, {pipeline_mode = #tpu.pipeline_mode<synchronous>, transform_indices = @transform_2, window_bounds = array<i64: 1, 128>}, {transform_indices = @transform_3, window_bounds = array<i64: 4, 128>}]} {
    %c0 = arith.constant 0 : index
    %c0_0 = arith.constant 0 : index
    %0 = vector.load %arg1[%c0, %c0_0] : memref<4x4xf32, #tpu.memory_space<vmem>>, vector<4x4xf32>
    %c0_1 = arith.constant 0 : index
    %c0_2 = arith.constant 0 : index
    %1 = vector.load %arg2[%c0_1, %c0_2] : memref<4x128xf32, #tpu.memory_space<vmem>>, vector<4x128xf32>
    %cst = arith.constant dense<0.000000e+00> : vector<4x128xf32>
    %2 = tpu.matmul %0, %1, %cst {dimension_numbers = #tpu.dot_dimension_numbers<[1], [0], [0], [1], [0, 0, 1, 1], [], []>} : vector<4x4xf32>, vector<4x128xf32>, vector<4x128xf32> -> vector<4x128xf32>
    %c0_3 = arith.constant 0 : index
    %c0_4 = arith.constant 0 : index
    %3 = vector.load %arg3[%c0_3, %c0_4] : memref<1x128xf32, #tpu.memory_space<vmem>>, vector<1x128xf32>
    %4 = vector.broadcast %3 : vector<1x128xf32> to vector<4x128xf32>
    %5 = arith.addf %2, %4 : vector<4x128xf32>
    %c0_5 = arith.constant 0 : index
    %c0_6 = arith.constant 0 : index
    %6 = vector.load %arg4[%c0_5, %c0_6] : memref<4x128xf32, #tpu.memory_space<vmem>>, vector<4x128xf32>
    tpu.vector_store %arg4[%c0_5, %c0_6], %5 {strides = array<i32>} : memref<4x128xf32, #tpu.memory_space<vmem>>, vector<4x128xf32>,
    return
  }
  func.func @transform_0(%arg0: i32) -> (i32, i32) {
    %c0_i32 = arith.constant 0 : i32
    %c0_i32_0 = arith.constant 0 : i32
    return %arg0, %c0_i32 : i32, i32
  }
  func.func @transform_1(%arg0: i32) -> (i32, i32) {
    %c0_i32 = arith.constant 0 : i32
    %c0_i32_0 = arith.constant 0 : i32
    %c0_i32_1 = arith.constant 0 : i32
    return %c0_i32, %c0_i32_0 : i32, i32
  }
  func.func @transform_2(%arg0: i32) -> (i32, i32) {
    %c0_i32 = arith.constant 0 : i32
    %c0_i32_0 = arith.constant 0 : i32
    %c0_i32_1 = arith.constant 0 : i32
    return %c0_i32, %c0_i32_0 : i32, i32
  }
  func.func @transform_3(%arg0: i32) -> (i32, i32) {
    %c0_i32 = arith.constant 0 : i32
    %c0_i32_0 = arith.constant 0 : i32
    return %arg0, %c0_i32 : i32, i32
  }
}

</mosaic_0001>

<llo_original>
// kernel: tpu_custom_call.1
$region0: #{tpu_custom_call.1}
  #allocation0 [shape = 'u32[]', space=smem, size = 0x4, offset = 0x4, fixed_abs, tag = 'smem constant byte address 0x4 - core index']
  #allocation1 [shape = 'u32[144,128]{1,0:T(1,128)}', space=vmem, size = 0x12000, scoped, tag = 'internal scratch']
  %s0 = inlined_call_operand.hbm [shape: f32[4,4], index: 0, kind: input, shape index: {}]
  %s1 = inlined_call_operand.hbm [shape: f32[4,128], index: 1, kind: input, shape index: {}]
  %s2 = inlined_call_operand.vmem [shape: f32[1,128], index: 2, kind: input, shape index: {}]
  %s3 = inlined_call_operand.hbm [shape: f32[4,128], index: 3, kind: output, shape index: {}]
  %s4 = sld [smem:[#allocation0]]
  $region30: #{tpu_custom_call.1} parent=0
    _
  %s6 = ssub.s32 1, %s4
  %s7 = scalar_select 0, %s6, %s4
  $region1: #{tpu_custom_call.1} parent=0
    #allocation2 [shape = 'u8[2048]{0}', space=vmem, size = 0x800, scoped, tag = 'input window, operand 0, single buffered']
    #allocation3 [shape = 's32[1]{0}', space=sflag, size = 0x4, scoped, tag = 'scoped memory for tpu_custom_call.1']
    #allocation4 [shape = 's32[1]{0}', space=sflag, size = 0x4, scoped, tag = 'scoped memory for tpu_custom_call.1']
    #allocation5 [shape = 'u8[2048]{0}', space=vmem, size = 0x800, scoped, tag = 'input window, operand 1, single buffered']
    #allocation6 [shape = 's32[1]{0}', space=sflag, size = 0x4, scoped, tag = 'scoped memory for tpu_custom_call.1']
    #allocation7 [shape = 'u8[2048]{0}', space=vmem, size = 0x800, scoped, tag = 'output window, operand 0, single buffered']
    %8 = vsyncpa [#allocation3], 0
    %9 = vsyncpa [#allocation6], 0
    %10 = vsyncpa [#allocation4], 0
    // Predicated region
    $region2: #{tpu_custom_call.1} parent=1 // pred_check
      _
    $region3: #{tpu_custom_call.1} parent=1 // pred_check_branch
      %12 = sbr.rel (0) target = $region5
    $region4: #{tpu_custom_call.1} parent=1 // pred_region
      %s14 = ssub.s32 64, 64
      %15 = vsyncadd [#allocation3], %s14
      %s17 = sshll.u32 [#allocation2], 4
      %s18 = int_to_ptr.vmem [resolvable:$true] %s17
      %20 = dma.hbm_to_vmem [thread:$0]  %s0, 64, %s18, [#allocation3]
    $region5: #{tpu_custom_call.1} parent=1 // pred_fallthru
      _
    // Predicated region
    $region6: #{tpu_custom_call.1} parent=1 // pred_check
      _
    $region7: #{tpu_custom_call.1} parent=1 // pred_check_branch
      %22 = sbr.rel (0) target = $region9
    $region8: #{tpu_custom_call.1} parent=1 // pred_region
      %s24 = ssub.s32 64, 64
      %25 = vsyncadd [#allocation6], %s24
      %s27 = sshll.u32 [#allocation5], 4
      %s28 = int_to_ptr.vmem [resolvable:$true] %s27
      %30 = dma.hbm_to_vmem [thread:$0]  %s1, 64, %s28, [#allocation6]
    $region9: #{tpu_custom_call.1} parent=1 // pred_fallthru
      _
    // Predicated region
    $region10: #{tpu_custom_call.1} parent=1 // pred_check
      _
    $region11: #{tpu_custom_call.1} parent=1 // pred_check_branch
      %32 = sbr.rel (0) target = $region13
    $region12: #{tpu_custom_call.1} parent=1 // pred_region
      _
    $region13: #{tpu_custom_call.1} parent=1 // pred_fallthru
      _
    // Predicated region
    $region14: #{tpu_custom_call.1} parent=1 // pred_check
      _
    $region15: #{tpu_custom_call.1} parent=1 // pred_check_branch
      %34 = sbr.rel (0) target = $region17
    $region16: #{tpu_custom_call.1} parent=1 // pred_region
      %35 = dma.done [#allocation3], 64
    $region17: #{tpu_custom_call.1} parent=1 // pred_fallthru
      _
    // Predicated region
    $region18: #{tpu_custom_call.1} parent=1 // pred_check
      _
    $region19: #{tpu_custom_call.1} parent=1 // pred_check_branch
      %37 = sbr.rel (0) target = $region21
    $region20: #{tpu_custom_call.1} parent=1 // pred_region
      %38 = dma.done [#allocation6], 64
    $region21: #{tpu_custom_call.1} parent=1 // pred_fallthru
      _
    %v39 = vld [vmem:[#allocation2] sm:$0xf]
    %v40 = vld [vmem:[#allocation5] sm:$0xf]
    %v41 = vld [vmem:[%s2] sm:$0x1]
    %v43 = vlaneseq
    %v44 = vshrl.u32 %v43, 7
    %v45 = vsub.s32 0, %v44
    %v46 = vrot.slane %v41, %v45
    %vm48 = vcmask 31744
    %v50 = vsel %vm48, %v39, 0
    %vm52 = vcmask 1043456
    %v54 = vsel %vm52, %v40, 0
    %56 = vmatprep.subr.mxu0 0.0
    %57 = vmatpush1.msra.mxu0 %v54
    %58 = vmatprep.subr.mxu0 0.0
    %59 = vmatpush1.msra.mxu0 0.0
    %60 = vmatprep.subr.mxu0 0.0
    %61 = vmatpush1.msra.mxu0 0.0
    %62 = vmatprep.subr.mxu0 0.0
    %63 = vmatpush1.msra.mxu0 0.0
    %64 = vmatprep.subr.mxu0 0.0
    %65 = vmatpush1.msra.mxu0 0.0
    %66 = vmatprep.subr.mxu0 0.0
    %67 = vmatpush1.msra.mxu0 0.0
    %68 = vmatprep.subr.mxu0 0.0
    %69 = vmatpush1.msra.mxu0 0.0
    %70 = vmatprep.subr.mxu0 0.0
    %71 = vmatpush1.msra.mxu0 0.0
    %72 = vmatprep.subr.mxu0 0.0
    %73 = vmatpush1.msra.mxu0 0.0
    %74 = vmatprep.subr.mxu0 0.0
    %75 = vmatpush1.msra.mxu0 0.0
    %76 = vmatprep.subr.mxu0 0.0
    %77 = vmatpush1.msra.mxu0 0.0
    %78 = vmatprep.subr.mxu0 0.0
    %79 = vmatpush1.msra.mxu0 0.0
    %80 = vmatprep.subr.mxu0 0.0
    %81 = vmatpush1.msra.mxu0 0.0
    %82 = vmatprep.subr.mxu0 0.0
    %83 = vmatpush1.msra.mxu0 0.0
    %84 = vmatprep.subr.mxu0 0.0
    %85 = vmatpush1.msra.mxu0 0.0
    %86 = vmatprep.subr.mxu0 0.0
    %87 = vmatpush1.msra.mxu0 0.0
    %88 = vmatprep.subr.mxu0 0.0
    %89 = vmatpush1.msra.mxu0 0.0
    %90 = vmatprep.subr.mxu0 0.0
    %91 = vmatpush1.msra.mxu0 0.0
    %92 = vmatprep.subr.mxu0 0.0
    %93 = vmatpush1.msra.mxu0 0.0
    %94 = vmatprep.subr.mxu0 0.0
    %95 = vmatpush1.msra.mxu0 0.0
    %96 = vmatprep.subr.mxu0 0.0
    %97 = vmatpush1.msra.mxu0 0.0
    %98 = vmatprep.subr.mxu0 0.0
    %99 = vmatpush1.msra.mxu0 0.0
    %100 = vmatprep.subr.mxu0 0.0
    %101 = vmatpush1.msra.mxu0 0.0
    %102 = vmatprep.subr.mxu0 0.0
    %103 = vmatpush1.msra.mxu0 0.0
    %104 = vmatprep.subr.mxu0 0.0
    %105 = vmatpush1.msra.mxu0 0.0
    %106 = vmatprep.subr.mxu0 0.0
    %107 = vmatpush1.msra.mxu0 0.0
    %108 = vmatprep.subr.mxu0 0.0
    %109 = vmatpush1.msra.mxu0 0.0
    %110 = vmatprep.subr.mxu0 0.0
    %111 = vmatpush1.msra.mxu0 0.0
    %112 = vmatprep.subr.mxu0 0.0
    %113 = vmatpush1.msra.mxu0 0.0
    %114 = vmatprep.subr.mxu0 0.0
    %115 = vmatpush1.msra.mxu0 0.0
    %116 = vmatprep.subr.mxu0 0.0
    %117 = vmatpush1.msra.mxu0 0.0
    %118 = vmatprep.subr.mxu0 0.0
    %119 = vmatpush1.msra.mxu0 0.0
    %120 = vmatprep.mubr.f32.mxu0 0.0
    %121 = vmatmul.mubr.f32.gmra.mrb[0].mxu0 %v50
    %v122 = vpop.f32.mrb[0].mxu0
    %v123 = vadd.f32 %v46, %v122
    %v124 = vpop.f32.mrb[0].mxu0
    %125 = vdwg.mxu0
    %126 = vst [vmem:[#allocation7] sm:$0xf] %v123
    // Predicated region
    $region22: #{tpu_custom_call.1} parent=1 // pred_check
      _
    $region23: #{tpu_custom_call.1} parent=1 // pred_check_branch
      %128 = sbr.rel (0) target = $region25
    $region24: #{tpu_custom_call.1} parent=1 // pred_region
      %s130 = ssub.s32 64, 64
      %131 = vsyncadd [#allocation4], %s130
      %s133 = sshll.u32 [#allocation7], 4
      %s134 = int_to_ptr.vmem [resolvable:$true] %s133
      %136 = dma.vmem_to_hbm [thread:$0]  %s134, 64, %s3, [#allocation4]
    $region25: #{tpu_custom_call.1} parent=1 // pred_fallthru
      _
    // Predicated region
    $region26: #{tpu_custom_call.1} parent=1 // pred_check
      _
    $region27: #{tpu_custom_call.1} parent=1 // pred_check_branch
      %138 = sbr.rel (0) target = $region29
    $region28: #{tpu_custom_call.1} parent=1 // pred_region
      %139 = dma.done [#allocation4], 64
    $region29: #{tpu_custom_call.1} parent=1 // pred_fallthru
      _
    %140 = vsyncpa [#allocation3], 1
    %141 = vsyncpa [#allocation6], 1
    %142 = vsyncpa [#allocation4], 1

</llo_original>
